<compile_context>
chip_gen: v7x
topology: tpu7x:2x2x1
jax: 0.10.0
libtpu: 0.0.40
codegen_flags: <defaults>
</compile_context>

<pallas_src>
import functools

import jax
import jax.numpy as jnp
from jax.experimental import pallas as pl
from jax.experimental.pallas import tpu as pltpu


# ----------------------------------------------------------------------------
# Kernel 1: per-row-tile projection   Wh = h @ W_all ,  S = Wh @ A
# ----------------------------------------------------------------------------
def _proj_kernel(h_ref, w_ref, a_ref, wh_ref, s_ref, *, fast):
    h = h_ref[...]
    W = w_ref[...]
    if fast:
        h = h.astype(jnp.bfloat16)
        W = W.astype(jnp.bfloat16)
    Wh = jnp.dot(h, W, preferred_element_type=jnp.float32)          # (TM, HF)
    wh_ref[...] = Wh
    # per-row attention projections for every (head, network): (TM, 2*K*H)
    s_ref[...] = jnp.dot(Wh, a_ref[...], preferred_element_type=jnp.float32)


# ----------------------------------------------------------------------------
# Kernel 2: row-tiled multi-graph attention (all heads of a layer fused)
# ----------------------------------------------------------------------------
def _attn_kernel(wh_ref, st_ref, s_tile_ref, adj_ref, o_ref, *,
                 alpha, nheads, out_f, no_networks, activation, fast):
    Wh = wh_ref[...]             # (N, HF)  f32, resident across the grid
    ST = st_ref[...]             # (C, N)   f32, resident (S transposed on host)
    St = s_tile_ref[...]         # (TM, C)  f32, this row tile's projections
    tile_m = St.shape[0]
    N = Wh.shape[0]

    Wh_mm = Wh.astype(jnp.bfloat16) if fast else Wh

    outs = []
    # Static unroll is fine: nheads * no_networks is small.  For many networks
    # switch to lax.fori_loop(..., unroll=True) with a VMEM accumulator.
    for hd in range(nheads):
        att = jnp.zeros((tile_m, N), jnp.float32)
        for n in range(no_networks):
            c = (hd * no_networks + n) * 2
            # e_tj = s1_t + s2_j   (wts already folded into the a-vectors)
            e = St[:, c:c + 1] + ST[c + 1:c + 2, :]            # (TM,1)+(1,N)
            e = jnp.where(e > 0, e, alpha * e)                 # LeakyReLU(alpha)
            att = att + jnp.where(adj_ref[n] > 0, e, 0.0)      # adjacency mask
        # row softmax (dim=1)
        m = jnp.max(att, axis=1, keepdims=True)
        p = jnp.exp(att - m)
        l = jnp.sum(p, axis=1, keepdims=True)
        if fast:
            p = (p * pl.reciprocal(l, approx=True)).astype(jnp.bfloat16)
        else:
            p = p / l
        hp = jnp.dot(p, Wh_mm[:, hd * out_f:(hd + 1) * out_f],
                     preferred_element_type=jnp.float32)       # (TM, out_f)
        outs.append(hp)
    hp = outs[0] if nheads == 1 else jnp.concatenate(outs, axis=1)  # (TM, HF)

    if activation in ("elu", "elu_sigmoid"):
        # TODO(synk): jnp.expm1 would be marginally more accurate for tiny
        # negative inputs; exp(x)-1 (abs err <= ~1 ulp of 1) keeps lowering simple.
        hp = jnp.where(hp > 0, hp, jnp.exp(jnp.minimum(hp, 0.0)) - 1.0)
    if activation == "elu_sigmoid":
        hp = 1.0 / (1.0 + jnp.exp(-hp))
    o_ref[...] = hp


# ----------------------------------------------------------------------------
# Layer wrapper
# ----------------------------------------------------------------------------
def _pick_tile_m(n):
    for t in (512, 256, 128):
        if n % t == 0 and n > t:
            return t
    return n


def build_attention_matrix(a_list, nw_list, out_f, no_networks):
    """Block-diagonal stack of all (head, network) a1/a2 vectors, pre-scaled by
    wts = softmax(nw).  Shape: (nheads*out_f, nheads*no_networks*2)."""
    blocks = []
    for a, nw in zip(a_list, nw_list):
        wts = jax.nn.softmax(nw.astype(jnp.float32), axis=0)          # (K, 1)
        a_r = a.reshape(no_networks, 2, out_f).astype(jnp.float32)    # [n,{a1,a2},F]
        a_s = a_r * wts[:, :, None]
        blocks.append(a_s.reshape(no_networks * 2, out_f).T)          # (F, 2K)
    return jax.scipy.linalg.block_diag(*blocks)


def mga_layer(h, W_all, A, adjs_i8, *, nheads, out_f, alpha, activation,
              fast=True, tile_m=None):
    """One fused MultiGraphAttention layer (all `nheads` heads at once).

    h       : (N, in_f) f32
    W_all   : (in_f, nheads * out_f) f32
    A       : (nheads * out_f, nheads * no_networks * 2) f32 (wts-scaled, block-diag)
    adjs_i8 : (no_networks, N, N) int8 (0/1)
    """
    N, in_f = h.shape
    HF = W_all.shape[1]
    K = adjs_i8.shape[0]
    C = A.shape[1]
    assert HF == nheads * out_f and C == 2 * K * nheads
    if tile_m is None:
        tile_m = _pick_tile_m(N)
    assert N % tile_m == 0 and (tile_m % 8 == 0 or tile_m == N)
    grid = (N // tile_m,)

    # ---- kernel 1: Wh = h @ W_all ; S = Wh @ A ------------------------------
    wh, s = pl.pallas_call(
        functools.partial(_proj_kernel, fast=fast),
        out_shape=(jax.ShapeDtypeStruct((N, HF), jnp.float32),
                   jax.ShapeDtypeStruct((N, C), jnp.float32)),
        grid_spec=pltpu.PrefetchScalarGridSpec(
            num_scalar_prefetch=0, grid=grid,
            in_specs=[pl.BlockSpec((tile_m, in_f), lambda i: (i, 0)),
                      pl.BlockSpec((in_f, HF), lambda i: (0, 0)),
                      pl.BlockSpec((HF, C), lambda i: (0, 0))],
            out_specs=(pl.BlockSpec((tile_m, HF), lambda i: (i, 0)),
                       pl.BlockSpec((tile_m, C), lambda i: (i, 0)))),
        compiler_params=pltpu.CompilerParams(
            dimension_semantics=("parallel",)),
    )(h, W_all, A)

    st = s.T   # (C, N): host-side layout plumbing, done once per layer

    # VMEM budget: resident Wh/S^T/S-tile + double-buffered int8 adj tile +
    # output tile + elementwise working set.
    est = (4 * (N * HF + 2 * N * C + 2 * tile_m * C)
           + 2 * K * tile_m * N
           + 2 * 4 * tile_m * HF
           + 8 * 4 * tile_m * N)
    vmem_limit = int(min(max(2 * est, 32 << 20), 64 << 20))

    kern = functools.partial(_attn_kernel, alpha=alpha, nheads=nheads,
                             out_f=out_f, no_networks=K,
                             activation=activation, fast=fast)
    return pl.pallas_call(
        kern,
        out_shape=jax.ShapeDtypeStruct((N, HF), jnp.float32),
        grid_spec=pltpu.PrefetchScalarGridSpec(
            num_scalar_prefetch=0, grid=grid,
            in_specs=[
                pl.BlockSpec((N, HF), lambda i: (0, 0)),            # Wh (resident)
                pl.BlockSpec((C, N), lambda i: (0, 0)),             # S^T (resident)
                pl.BlockSpec((tile_m, C), lambda i: (i, 0)),        # S row tile
                pl.BlockSpec((K, tile_m, N), lambda i: (0, i, 0)),  # adj row tile
            ],
            out_specs=pl.BlockSpec((tile_m, HF), lambda i: (i, 0))),
        compiler_params=pltpu.CompilerParams(
            dimension_semantics=("parallel",),
            vmem_limit_bytes=vmem_limit),
    )(wh, st, s, adjs_i8)


# ----------------------------------------------------------------------------
# MGAT model (glue in plain JAX, per-layer compute in the Pallas kernels).
# ----------------------------------------------------------------------------
def mgat_forward(x, adjs, params, *, alpha, fast=True, tile_m=None):
    adjs_i8 = (adjs > 0).astype(jnp.int8)       # 0/1 mask; 4x less HBM/VMEM than f32
    heads = params["heads"]
    K = adjs.shape[0]
    nhid = heads[0]["W"].shape[1]
    nclass = params["out"]["W"].shape[1]

    # dropout(x) -> identity (eval mode)
    # layer 1: all heads fused (adjacency streamed once for all heads),
    # concat=True so ELU is applied inside the kernel; output already concatenated.
    W_all = jnp.concatenate([p["W"] for p in heads], axis=1)
    A1 = build_attention_matrix([p["a"] for p in heads],
                                [p["nw"] for p in heads], nhid, K)
    h1 = mga_layer(x, W_all, A1, adjs_i8, nheads=len(heads), out_f=nhid,
                   alpha=alpha, activation="elu", fast=fast, tile_m=tile_m)

    # dropout(h1) -> identity (eval mode)
    # layer 2 (out_att, concat=False); F.elu + sigmoid fused into the kernel.
    po = params["out"]
    A2 = build_attention_matrix([po["a"]], [po["nw"]], nclass, K)
    return mga_layer(h1, po["W"], A2, adjs_i8, nheads=1, out_f=nclass,
                     alpha=alpha, activation="elu_sigmoid", fast=fast,
                     tile_m=tile_m)


# ----------------------------------------------------------------------------
# Deterministic parameter init (xavier_uniform, gain=1.414, like the module).
# ----------------------------------------------------------------------------
def xavier_uniform(key, shape, gain=1.414):
    fan_in, fan_out = shape[0], shape[1]
    limit = gain * (6.0 / (fan_in + fan_out)) ** 0.5
    return jax.random.uniform(key, shape, jnp.float32, -limit, limit)


def init_mgat_params(key, nfeat, nhid, nclass, nheads, no_networks):
    params = {"heads": [], "out": {}}
    for _ in range(nheads):
        key, k1, k2, k3 = jax.random.split(key, 4)
        params["heads"].append({
            "W": xavier_uniform(k1, (nfeat, nhid)),
            "a": xavier_uniform(k2, (2 * no_networks * nhid, 1)),
            "nw": xavier_uniform(k3, (no_networks, 1)),
        })
    key, k1, k2, k3 = jax.random.split(key, 4)
    params["out"] = {
        "W": xavier_uniform(k1, (nhid * nheads, nclass)),
        "a": xavier_uniform(k2, (2 * no_networks * nclass, 1)),
        "nw": xavier_uniform(k3, (no_networks, 1)),
    }
    return params


# ----------------------------------------------------------------------------
# Pure-JAX reference (mirrors the PyTorch module, f32 everywhere).
# ----------------------------------------------------------------------------
def _mga_ref(h, W, a, nw, adjs, *, alpha, concat):
    out_f = W.shape[1]
    Wh = h @ W
    wts = jax.nn.softmax(nw, axis=0)
    att = jnp.zeros((h.shape[0], h.shape[0]), jnp.float32)
    for i in range(adjs.shape[0]):
        a1 = a[out_f * 2 * i: out_f * (2 * i + 1), :]
        a2 = a[out_f * (2 * i + 1): out_f * (2 * i + 2), :]
        e = Wh @ a1 + (Wh @ a2).T
        e = jnp.where(e > 0, e, alpha * e)
        att = att + wts[i, 0] * jnp.where(adjs[i] > 0, e, 0.0)
    att = jax.nn.softmax(att, axis=1)
    hp = att @ Wh
    return jax.nn.elu(hp) if concat else hp


def _mgat_ref(x, adjs, params, *, alpha):
    outs = [_mga_ref(x, p["W"], p["a"], p["nw"], adjs, alpha=alpha, concat=True)
            for p in params["heads"]]
    x = jnp.concatenate(outs, axis=1)
    po = params["out"]
    hp = _mga_ref(x, po["W"], po["a"], po["nw"], adjs, alpha=alpha, concat=False)
    return jax.nn.sigmoid(jax.nn.elu(hp))


if __name__ == "__main__":
    # Small shapes consistent with the module's forward (exercises grid = 2 row tiles).
    N, nfeat, nhid, nclass = 256, 64, 16, 8
    nheads, no_networks = 4, 2
    alpha = 0.2

    key = jax.random.PRNGKey(0)
    key, kx, ka, kp = jax.random.split(key, 4)

    x = jax.random.normal(kx, (N, nfeat), jnp.float32)
    adjs = (jax.random.uniform(ka, (no_networks, N, N)) > 0.6).astype(jnp.float32)
    # make sure each node has at least itself as a neighbor
    adjs = jnp.maximum(adjs, jnp.eye(N, dtype=jnp.float32)[None])

    params = init_mgat_params(kp, nfeat, nhid, nclass, nheads, no_networks)

    ref = _mgat_ref(x, adjs, params, alpha=alpha)

    # Exact (f32) path: tight functional check against the pure-JAX reference.
    out_exact = jax.block_until_ready(
        mgat_forward(x, adjs, params, alpha=alpha, fast=False))
    assert out_exact.shape == (N, nclass)
    assert jnp.allclose(out_exact, ref, atol=1e-4, rtol=1e-4), "f32 kernel mismatch"

    # Fast path (bf16 MXU inputs + approx reciprocal): validated to bf16 tolerance.
    out_fast = jax.block_until_ready(
        mgat_forward(x, adjs, params, alpha=alpha, fast=True))
    assert out_fast.shape == (N, nclass)
    assert jnp.allclose(out_fast, ref, atol=5e-2, rtol=5e-2), "bf16 kernel mismatch"

    print("KERNEL_OK")
</pallas_src>

<mosaic_0001>
module attributes {stable_mosaic.version = 11 : i64} {
  func.func @_proj_kernel(%arg0: i32, %arg1: memref<128x64xf32, #tpu.memory_space<vmem>>, %arg2: memref<64x64xf32, #tpu.memory_space<vmem>>, %arg3: memref<64x16xf32, #tpu.memory_space<vmem>>, %arg4: memref<128x64xf32, #tpu.memory_space<vmem>>, %arg5: memref<128x16xf32, #tpu.memory_space<vmem>>) attributes {dimension_semantics = [#tpu.dimension_semantics<parallel>], iteration_bounds = array<i64: 2>, scalar_prefetch = 0 : i64, scratch_operands = 0 : i64, tpu.core_type = #tpu.core_type<tc>, window_params = [{transform_indices = @transform_0, window_bounds = array<i64: 128, 64>}, {pipeline_mode = #tpu.pipeline_mode<synchronous>, transform_indices = @transform_1, window_bounds = array<i64: 64, 64>}, {pipeline_mode = #tpu.pipeline_mode<synchronous>, transform_indices = @transform_2, window_bounds = array<i64: 64, 16>}, {transform_indices = @transform_3, window_bounds = array<i64: 128, 64>}, {transform_indices = @transform_4, window_bounds = array<i64: 128, 16>}]} {
    %c0 = arith.constant 0 : index
    %c0_0 = arith.constant 0 : index
    %0 = vector.load %arg1[%c0, %c0_0] : memref<128x64xf32, #tpu.memory_space<vmem>>, vector<128x64xf32>
    %c0_1 = arith.constant 0 : index
    %c0_2 = arith.constant 0 : index
    %1 = vector.load %arg2[%c0_1, %c0_2] : memref<64x64xf32, #tpu.memory_space<vmem>>, vector<64x64xf32>
    %cst = arith.constant dense<0.000000e+00> : vector<128x64xf32>
    %2 = tpu.matmul %0, %1, %cst {dimension_numbers = #tpu.dot_dimension_numbers<[1], [0], [0], [1], [0, 0, 1, 1], [], []>} : vector<128x64xf32>, vector<64x64xf32>, vector<128x64xf32> -> vector<128x64xf32>
    %c0_3 = arith.constant 0 : index
    %c0_4 = arith.constant 0 : index
    %3 = vector.load %arg4[%c0_3, %c0_4] : memref<128x64xf32, #tpu.memory_space<vmem>>, vector<128x64xf32>
    tpu.vector_store %arg4[%c0_3, %c0_4], %2 {strides = array<i32>} : memref<128x64xf32, #tpu.memory_space<vmem>>, vector<128x64xf32>,
    %c0_5 = arith.constant 0 : index
    %c0_6 = arith.constant 0 : index
    %4 = vector.load %arg3[%c0_5, %c0_6] : memref<64x16xf32, #tpu.memory_space<vmem>>, vector<64x16xf32>
    %cst_7 = arith.constant dense<0.000000e+00> : vector<128x16xf32>
    %5 = tpu.matmul %2, %4, %cst_7 {dimension_numbers = #tpu.dot_dimension_numbers<[1], [0], [0], [1], [0, 0, 1, 1], [], []>} : vector<128x64xf32>, vector<64x16xf32>, vector<128x16xf32> -> vector<128x16xf32>
    %c0_8 = arith.constant 0 : index
    %c0_9 = arith.constant 0 : index
    %6 = vector.load %arg5[%c0_8, %c0_9] : memref<128x16xf32, #tpu.memory_space<vmem>>, vector<128x16xf32>
    tpu.vector_store %arg5[%c0_8, %c0_9], %5 {strides = array<i32>} : memref<128x16xf32, #tpu.memory_space<vmem>>, vector<128x16xf32>,
    return
  }
  func.func @transform_0(%arg0: i32) -> (i32, i32) {
    %c0_i32 = arith.constant 0 : i32
    %c0_i32_0 = arith.constant 0 : i32
    return %arg0, %c0_i32 : i32, i32
  }
  func.func @transform_1(%arg0: i32) -> (i32, i32) {
    %c0_i32 = arith.constant 0 : i32
    %c0_i32_0 = arith.constant 0 : i32
    %c0_i32_1 = arith.constant 0 : i32
    return %c0_i32, %c0_i32_0 : i32, i32
  }
  func.func @transform_2(%arg0: i32) -> (i32, i32) {
    %c0_i32 = arith.constant 0 : i32
    %c0_i32_0 = arith.constant 0 : i32
    %c0_i32_1 = arith.constant 0 : i32
    return %c0_i32, %c0_i32_0 : i32, i32
  }
  func.func @transform_3(%arg0: i32) -> (i32, i32) {
    %c0_i32 = arith.constant 0 : i32
    %c0_i32_0 = arith.constant 0 : i32
    return %arg0, %c0_i32 : i32, i32
  }
  func.func @transform_4(%arg0: i32) -> (i32, i32) {
    %c0_i32 = arith.constant 0 : i32
    %c0_i32_0 = arith.constant 0 : i32
    return %arg0, %c0_i32 : i32, i32
  }
}

</mosaic_0001>

<llo_original>
// kernel: tpu_custom_call.1
$region0: #{tpu_custom_call.1}
  #allocation0 [shape = 'u32[]', space=smem, size = 0x4, offset = 0x4, fixed_abs, tag = 'smem constant byte address 0x4 - core index']
  #allocation1 [shape = 'u32[144,128]{1,0:T(1,128)}', space=vmem, size = 0x12000, scoped, tag = 'internal scratch']
  %s0 = inlined_call_operand.vmem [shape: f32[256,64], index: 0, kind: input, shape index: {}]
  %s1 = inlined_call_operand.vmem [shape: f32[64,64], index: 1, kind: input, shape index: {}]
  %s2 = inlined_call_operand.vmem [shape: f32[64,16], index: 2, kind: input, shape index: {}]
  %s3 = inlined_call_operand.vmem [shape: f32[256,64], index: 3, kind: output, shape index: {0}]
  %s4 = inlined_call_operand.vmem [shape: f32[256,16], index: 4, kind: output, shape index: {1}]
  %5 = xla_tuple %s3, %s4
  %s6 = sld [smem:[#allocation0]]
  $region53: #{tpu_custom_call.1} parent=0
    _
  %s8 = ssub.s32 1, %s6
  %s9 = scalar_select 0, %s8, %s6
  loop: start=0, step=1, limit=4
  $region2: #{tpu_custom_call.1} parent=0 // loop_pre_header
    _
  $region3: #{tpu_custom_call.1} parent=0 // loop_header
    %s11 = sphi 0, %s15
    %p12 = scmp.ge.s32.totalorder %s11, 4
    %s21 = sphi 0, %s23
    %s24 = sphi 0, %s21
    %s25 = sphi 0, %s24
    %s41 = sphi 0, %s25
    %s45 = sphi 0, %s45
    %s47 = sphi 0, %s45
    %s48 = sphi 0, %s47
    %s62 = sphi 0, %s48
    %s66 = sphi 0, %s66
    %s68 = sphi 0, %s66
    %s69 = sphi 0, %s68
    %s83 = sphi 0, %s69
    %s89 = sphi 0, %s91
    %s92 = sphi 0, %s89
    %s93 = sphi 0, %s92
    %s109 = sphi 0, %s93
    %s115 = sphi 0, %s117
    %s118 = sphi 0, %s115
    %s119 = sphi 0, %s118
    %s135 = sphi 0, %s119
  $region4: #{tpu_custom_call.1} parent=0 // loop_header_branch
    %14 = sbr.rel (%p12) target = $region8
  $region5: #{tpu_custom_call.1} parent=0 // loop_body
    %s16 = ssub.s32 %s11, 1
    %s17 = ssub.s32 %s11, 2
    %s18 = sadd.s32 %s11, 1
    %s19 = ssub.s32 %s11, %s18
    %p20 = scmp.eq.s32.totalorder %s19, 0
    %s22 = sadd.s32 %s21, 1
    %s23 = scalar_select %p20, %s21, %s22
    %p26 = pneg %p20
    %p27 = scmp.eq.s32.totalorder %s11, 1
    %p28 = por %p26, %p27
    %p29 = scmp.ne.s32.totalorder %s21, %s24
    %p30 = scmp.eq.s32.totalorder %s11, 0
    %p31 = por %p29, %p30
    %p32 = scmp.ne.s32.totalorder %s21, %s24
    %p33 = scmp.eq.s32.totalorder %s16, 1
    %p34 = por %p32, %p33
    %p35 = scmp.ne.s32.totalorder %s24, %s25
    %p36 = scmp.eq.s32.totalorder %s16, 0
    %p37 = por %p35, %p36
    %p38 = scmp.ne.s32.totalorder %s24, %s25
    %p39 = scmp.eq.s32.totalorder %s17, 1
    %p40 = por %p38, %p39
    %p42 = scmp.ne.s32.totalorder %s25, %s41
    %p43 = scmp.eq.s32.totalorder %s17, 0
    %p44 = por %p42, %p43
    %s46 = sadd.s32 %s45, 1
    %p49 = scmp.eq.s32.totalorder %s11, 1
    %p50 = scmp.ne.s32.totalorder %s45, %s47
    %p51 = scmp.eq.s32.totalorder %s11, 0
    %p52 = por %p50, %p51
    %p53 = scmp.ne.s32.totalorder %s45, %s47
    %p54 = scmp.eq.s32.totalorder %s16, 1
    %p55 = por %p53, %p54
    %p56 = scmp.ne.s32.totalorder %s47, %s48
    %p57 = scmp.eq.s32.totalorder %s16, 0
    %p58 = por %p56, %p57
    %p59 = scmp.ne.s32.totalorder %s47, %s48
    %p60 = scmp.eq.s32.totalorder %s17, 1
    %p61 = por %p59, %p60
    %p63 = scmp.ne.s32.totalorder %s48, %s62
    %p64 = scmp.eq.s32.totalorder %s17, 0
    %p65 = por %p63, %p64
    %s67 = sadd.s32 %s66, 1
    %p70 = scmp.eq.s32.totalorder %s11, 1
    %p71 = scmp.ne.s32.totalorder %s66, %s68
    %p72 = scmp.eq.s32.totalorder %s11, 0
    %p73 = por %p71, %p72
    %p74 = scmp.ne.s32.totalorder %s66, %s68
    %p75 = scmp.eq.s32.totalorder %s16, 1
    %p76 = por %p74, %p75
    %p77 = scmp.ne.s32.totalorder %s68, %s69
    %p78 = scmp.eq.s32.totalorder %s16, 0
    %p79 = por %p77, %p78
    %p80 = scmp.ne.s32.totalorder %s68, %s69
    %p81 = scmp.eq.s32.totalorder %s17, 1
    %p82 = por %p80, %p81
    %p84 = scmp.ne.s32.totalorder %s69, %s83
    %p85 = scmp.eq.s32.totalorder %s17, 0
    %p86 = por %p84, %p85
    %s87 = ssub.s32 %s11, %s18
    %p88 = scmp.eq.s32.totalorder %s87, 0
    %s90 = sadd.s32 %s89, 1
    %s91 = scalar_select %p88, %s89, %s90
    %p94 = pneg %p88
    %p95 = scmp.eq.s32.totalorder %s11, 1
    %p96 = por %p94, %p95
    %p97 = scmp.ne.s32.totalorder %s89, %s92
    %p98 = scmp.eq.s32.totalorder %s11, 0
    %p99 = por %p97, %p98
    %p100 = scmp.ne.s32.totalorder %s89, %s92
    %p101 = scmp.eq.s32.totalorder %s16, 1
    %p102 = por %p100, %p101
    %p103 = scmp.ne.s32.totalorder %s92, %s93
    %p104 = scmp.eq.s32.totalorder %s16, 0
    %p105 = por %p103, %p104
    %p106 = scmp.ne.s32.totalorder %s92, %s93
    %p107 = scmp.eq.s32.totalorder %s17, 1
    %p108 = por %p106, %p107
    %p110 = scmp.ne.s32.totalorder %s93, %s109
    %p111 = scmp.eq.s32.totalorder %s17, 0
    %p112 = por %p110, %p111
    %s113 = ssub.s32 %s11, %s18
    %p114 = scmp.eq.s32.totalorder %s113, 0
    %s116 = sadd.s32 %s115, 1
    %s117 = scalar_select %p114, %s115, %s116
    %p120 = pneg %p114
    %p121 = scmp.eq.s32.totalorder %s11, 1
    %p122 = por %p120, %p121
    %p123 = scmp.ne.s32.totalorder %s115, %s118
    %p124 = scmp.eq.s32.totalorder %s11, 0
    %p125 = por %p123, %p124
    %p126 = scmp.ne.s32.totalorder %s115, %s118
    %p127 = scmp.eq.s32.totalorder %s16, 1
    %p128 = por %p126, %p127
    %p129 = scmp.ne.s32.totalorder %s118, %s119
    %p130 = scmp.eq.s32.totalorder %s16, 0
    %p131 = por %p129, %p130
    %p132 = scmp.ne.s32.totalorder %s118, %s119
    %p133 = scmp.eq.s32.totalorder %s17, 1
    %p134 = por %p132, %p133
    %p136 = scmp.ne.s32.totalorder %s119, %s135
    %p137 = scmp.eq.s32.totalorder %s17, 0
    %p138 = por %p136, %p137
    %p139 = scmp.le.s32.totalorder 1, %s11
    %p140 = scmp.lt.s32.totalorder %s11, 3
    %p141 = pnand %p139, %p140
    %p142 = pneg %p141
    // Predicated region
    $region9: #{tpu_custom_call.1} parent=5 // pred_check
      _
    $region10: #{tpu_custom_call.1} parent=5 // pred_check_branch
      %144 = sbr.rel (%p141) target = $region12
    $region11: #{tpu_custom_call.1} parent=5 // pred_region
      %s145 = ssub.s32 %s11, 1
      // Predicated region
      $region13: #{tpu_custom_call.1} parent=11 // pred_check
        %p146 = pneg %p58
      $region14: #{tpu_custom_call.1} parent=11 // pred_check_branch
        %148 = sbr.rel (%p146) target = $region16
      $region15: #{tpu_custom_call.1} parent=11 // pred_region
        _
      $region16: #{tpu_custom_call.1} parent=11 // pred_fallthru
        _
      // Predicated region
      $region17: #{tpu_custom_call.1} parent=11 // pred_check
        %p149 = pneg %p79
      $region18: #{tpu_custom_call.1} parent=11 // pred_check_branch
        %151 = sbr.rel (%p149) target = $region20
      $region19: #{tpu_custom_call.1} parent=11 // pred_region
        _
      $region20: #{tpu_custom_call.1} parent=11 // pred_fallthru
        _
    $region12: #{tpu_custom_call.1} parent=5 // pred_fallthru
      _
    %p152 = scmp.lt.s32.totalorder %s11, 2
    // Predicated region
    $region21: #{tpu_custom_call.1} parent=5 // pred_check
      %p153 = pneg %p152
    $region22: #{tpu_custom_call.1} parent=5 // pred_check_branch
      %155 = sbr.rel (%p153) target = $region24
    $region23: #{tpu_custom_call.1} parent=5 // pred_region
      // Predicated region
      $region25: #{tpu_custom_call.1} parent=23 // pred_check
        %p156 = pneg %p31
      $region26: #{tpu_custom_call.1} parent=23 // pred_check_branch
        %158 = sbr.rel (%p156) target = $region28
      $region27: #{tpu_custom_call.1} parent=23 // pred_region
        %s159 = smul.u32 16, %s11
        %p160 = scmp.lt.s32.totalorder %s159, 31
        %s161 = scalar_select %p160, %s159, 31
        %s162 = smul.addr %s161, 8
        %s163 = scalar_lea.vmem %s0, %s162
        %s164 = smul.u32 16, %s11
      $region28: #{tpu_custom_call.1} parent=23 // pred_fallthru
        _
    $region24: #{tpu_custom_call.1} parent=5 // pred_fallthru
      _
    %p165 = scmp.le.s32.totalorder 1, %s11
    %p166 = scmp.lt.s32.totalorder %s11, 3
    %p167 = pnand %p165, %p166
    %p168 = pneg %p167
    // Predicated region
    $region29: #{tpu_custom_call.1} parent=5 // pred_check
      _
    $region30: #{tpu_custom_call.1} parent=5 // pred_check_branch
      %170 = sbr.rel (%p167) target = $region32
    $region31: #{tpu_custom_call.1} parent=5 // pred_region
      %s171 = ssub.s32 %s11, 1
      %s172 = smul.u32 16, %s16
      %p173 = scmp.lt.s32.totalorder %s172, 31
      %s174 = scalar_select %p173, %s172, 31
      %s175 = smul.addr %s174, 8
      %s176 = scalar_lea.vmem %s0, %s175
      %p177 = pneg %p37
      %p178 = pneg %p34
      %p179 = pneg %p58
      %p180 = pneg %p55
      %p181 = pneg %p79
      %p182 = pneg %p76
      %p183 = pneg %p105
      %p184 = pneg %p102
      %s185 = smul.u32 16, %s16
      %p186 = scmp.lt.s32.totalorder %s185, 31
      %s187 = scalar_select %p186, %s185, 31
      %s188 = smul.addr %s187, 8
      %s189 = scalar_lea.vmem %s3, %s188
      %p190 = pneg %p131
      %p191 = pneg %p128
      %s192 = smul.u32 16, %s16
      %p193 = scmp.lt.s32.totalorder %s192, 31
      %s194 = scalar_select %p193, %s192, 31
      %s195 = smul.addr %s194, 8
      %s196 = scalar_lea.vmem %s4, %s195
      %s197 = smul.u32 16, %s16
      %p198 = scmp.lt.s32.totalorder %s197, 31
      %s199 = scalar_select %p198, %s197, 31
      %s200 = smul.addr %s199, 8
      %s201 = scalar_lea.vmem %s0, %s200
      %s202 = smul.u32 16, %s16
      %s203 = smul.u32 16, %s16
      %p204 = scmp.lt.s32.totalorder %s203, 31
      %s205 = scalar_select %p204, %s203, 31
      %s206 = smul.addr %s205, 8
      %s207 = scalar_lea.vmem %s3, %s206
      %s208 = smul.u32 16, %s16
      %s209 = smul.u32 16, %s16
      %p210 = scmp.lt.s32.totalorder %s209, 31
      %s211 = scalar_select %p210, %s209, 31
      %s212 = smul.addr %s211, 8
      %s213 = scalar_lea.vmem %s4, %s212
      %s214 = smul.u32 16, %s16
      %v215 = vld [vmem:[%s201] sm:$0xff]
      %v216 = vld [vmem:[%s201 + $0x8] sm:$0xff]
      %v217 = vld [vmem:[%s201 + $0x10] sm:$0xff]
      %v218 = vld [vmem:[%s201 + $0x18] sm:$0xff]
      %v219 = vld [vmem:[%s201 + $0x20] sm:$0xff]
      %v220 = vld [vmem:[%s201 + $0x28] sm:$0xff]
      %v221 = vld [vmem:[%s201 + $0x30] sm:$0xff]
      %v222 = vld [vmem:[%s201 + $0x38] sm:$0xff]
      %v223 = vld [vmem:[%s201 + $0x40] sm:$0xff]
      %v224 = vld [vmem:[%s201 + $0x48] sm:$0xff]
      %v225 = vld [vmem:[%s201 + $0x50] sm:$0xff]
      %v226 = vld [vmem:[%s201 + $0x58] sm:$0xff]
      %v227 = vld [vmem:[%s201 + $0x60] sm:$0xff]
      %v228 = vld [vmem:[%s201 + $0x68] sm:$0xff]
      %v229 = vld [vmem:[%s201 + $0x70] sm:$0xff]
      %v230 = vld [vmem:[%s201 + $0x78] sm:$0xff]
      %v231 = vld [vmem:[%s1] sm:$0xff]
      %v232 = vld [vmem:[%s1 + $0x8] sm:$0xff]
      %v233 = vld [vmem:[%s1 + $0x10] sm:$0xff]
      %v234 = vld [vmem:[%s1 + $0x18] sm:$0xff]
      %v235 = vld [vmem:[%s1 + $0x20] sm:$0xff]
      %v236 = vld [vmem:[%s1 + $0x28] sm:$0xff]
      %v237 = vld [vmem:[%s1 + $0x30] sm:$0xff]
      %v238 = vld [vmem:[%s1 + $0x38] sm:$0xff]
      %vm239 = vcmask 523264
      %v241 = vsel %vm239, %v215, 0
      %v244 = vsel %vm239, %v216, 0
      %v247 = vsel %vm239, %v217, 0
      %v250 = vsel %vm239, %v218, 0
      %v253 = vsel %vm239, %v219, 0
      %v256 = vsel %vm239, %v220, 0
      %v259 = vsel %vm239, %v221, 0
      %v262 = vsel %vm239, %v222, 0
      %v265 = vsel %vm239, %v223, 0
      %v268 = vsel %vm239, %v224, 0
      %v271 = vsel %vm239, %v225, 0
      %v274 = vsel %vm239, %v226, 0
      %v277 = vsel %vm239, %v227, 0
      %v280 = vsel %vm239, %v228, 0
      %v283 = vsel %vm239, %v229, 0
      %v286 = vsel %vm239, %v230, 0
      %288 = vmatprep.subr.mxu0 0.0
      %289 = vmatpush1.msra.mxu0 %v231
      %290 = vmatprep.subr.mxu0 0.0
      %291 = vmatpush1.msra.mxu0 %v232
      %292 = vmatprep.subr.mxu0 0.0
      %293 = vmatpush1.msra.mxu0 %v233
      %294 = vmatprep.subr.mxu0 0.0
      %295 = vmatpush1.msra.mxu0 %v234
      %296 = vmatprep.subr.mxu0 0.0
      %297 = vmatpush1.msra.mxu0 %v235
      %298 = vmatprep.subr.mxu0 0.0
      %299 = vmatpush1.msra.mxu0 %v236
      %300 = vmatprep.subr.mxu0 0.0
      %301 = vmatpush1.msra.mxu0 %v237
      %302 = vmatprep.subr.mxu0 0.0
      %303 = vmatpush1.msra.mxu0 %v238
      %304 = vmatprep.subr.mxu0 0.0
      %305 = vmatpush1.msra.mxu0 0.0
      %306 = vmatprep.subr.mxu0 0.0
      %307 = vmatpush1.msra.mxu0 0.0
      %308 = vmatprep.subr.mxu0 0.0
      %309 = vmatpush1.msra.mxu0 0.0
      %310 = vmatprep.subr.mxu0 0.0
      %311 = vmatpush1.msra.mxu0 0.0
      %312 = vmatprep.subr.mxu0 0.0
      %313 = vmatpush1.msra.mxu0 0.0
      %314 = vmatprep.subr.mxu0 0.0
      %315 = vmatpush1.msra.mxu0 0.0
      %316 = vmatprep.subr.mxu0 0.0
      %317 = vmatpush1.msra.mxu0 0.0
      %318 = vmatprep.subr.mxu0 0.0
      %319 = vmatpush1.msra.mxu0 0.0
      %320 = vmatprep.subr.mxu0 0.0
      %321 = vmatpush1.msra.mxu0 0.0
      %322 = vmatprep.subr.mxu0 0.0
      %323 = vmatpush1.msra.mxu0 0.0
      %324 = vmatprep.subr.mxu0 0.0
      %325 = vmatpush1.msra.mxu0 0.0
      %326 = vmatprep.subr.mxu0 0.0
      %327 = vmatpush1.msra.mxu0 0.0
      %328 = vmatprep.subr.mxu0 0.0
      %329 = vmatpush1.msra.mxu0 0.0
      %330 = vmatprep.subr.mxu0 0.0
      %331 = vmatpush1.msra.mxu0 0.0
      %332 = vmatprep.subr.mxu0 0.0
      %333 = vmatpush1.msra.mxu0 0.0
      %334 = vmatprep.subr.mxu0 0.0
      %335 = vmatpush1.msra.mxu0 0.0
      %336 = vmatprep.subr.mxu0 0.0
      %337 = vmatpush1.msra.mxu0 0.0
      %338 = vmatprep.subr.mxu0 0.0
      %339 = vmatpush1.msra.mxu0 0.0
      %340 = vmatprep.subr.mxu0 0.0
      %341 = vmatpush1.msra.mxu0 0.0
      %342 = vmatprep.subr.mxu0 0.0
      %343 = vmatpush1.msra.mxu0 0.0
      %344 = vmatprep.subr.mxu0 0.0
      %345 = vmatpush1.msra.mxu0 0.0
      %346 = vmatprep.subr.mxu0 0.0
      %347 = vmatpush1.msra.mxu0 0.0
      %348 = vmatprep.subr.mxu0 0.0
      %349 = vmatpush1.msra.mxu0 0.0
      %350 = vmatprep.subr.mxu0 0.0
      %351 = vmatpush1.msra.mxu0 0.0
      %352 = vmatprep.mubr.f32.mxu0 0.0
      %353 = vmatmul.mubr.f32.gmra.mrb[0].mxu0 %v241
      %v354 = vpop.f32.mrb[0].mxu0
      %v355 = vadd.f32 0.0, %v354
      %v356 = vpop.f32.mrb[0].mxu0
      %357 = vmatprep.mubr.f32.mxu0 0.0
      %358 = vmatmul.mubr.f32.gmra.mrb[0].mxu0 %v244
      %v359 = vpop.f32.mrb[0].mxu0
      %v360 = vadd.f32 0.0, %v359
      %v361 = vpop.f32.mrb[0].mxu0
      %362 = vmatprep.mubr.f32.mxu0 0.0
      %363 = vmatmul.mubr.f32.gmra.mrb[0].mxu0 %v247
      %v364 = vpop.f32.mrb[0].mxu0
      %v365 = vadd.f32 0.0, %v364
      %v366 = vpop.f32.mrb[0].mxu0
      %367 = vmatprep.mubr.f32.mxu0 0.0
      %368 = vmatmul.mubr.f32.gmra.mrb[0].mxu0 %v250
      %v369 = vpop.f32.mrb[0].mxu0
      %v370 = vadd.f32 0.0, %v369
      %v371 = vpop.f32.mrb[0].mxu0
      %372 = vmatprep.mubr.f32.mxu0 0.0
      %373 = vmatmul.mubr.f32.gmra.mrb[0].mxu0 %v253
      %v374 = vpop.f32.mrb[0].mxu0
      %v375 = vadd.f32 0.0, %v374
      %v376 = vpop.f32.mrb[0].mxu0
      %377 = vmatprep.mubr.f32.mxu0 0.0
      %378 = vmatmul.mubr.f32.gmra.mrb[0].mxu0 %v256
      %v379 = vpop.f32.mrb[0].mxu0
      %v380 = vadd.f32 0.0, %v379
      %v381 = vpop.f32.mrb[0].mxu0
      %382 = vmatprep.mubr.f32.mxu0 0.0
      %383 = vmatmul.mubr.f32.gmra.mrb[0].mxu0 %v259
      %v384 = vpop.f32.mrb[0].mxu0
      %v385 = vadd.f32 0.0, %v384
      %v386 = vpop.f32.mrb[0].mxu0
      %387 = vmatprep.mubr.f32.mxu0 0.0
      %388 = vmatmul.mubr.f32.gmra.mrb[0].mxu0 %v262
      %v389 = vpop.f32.mrb[0].mxu0
      %v390 = vadd.f32 0.0, %v389
      %v391 = vpop.f32.mrb[0].mxu0
      %392 = vmatprep.mubr.f32.mxu0 0.0
      %393 = vmatmul.mubr.f32.gmra.mrb[0].mxu0 %v265
      %v394 = vpop.f32.mrb[0].mxu0
      %v395 = vadd.f32 0.0, %v394
      %v396 = vpop.f32.mrb[0].mxu0
      %397 = vmatprep.mubr.f32.mxu0 0.0
      %398 = vmatmul.mubr.f32.gmra.mrb[0].mxu0 %v268
      %v399 = vpop.f32.mrb[0].mxu0
      %v400 = vadd.f32 0.0, %v399
      %v401 = vpop.f32.mrb[0].mxu0
      %402 = vmatprep.mubr.f32.mxu0 0.0
      %403 = vmatmul.mubr.f32.gmra.mrb[0].mxu0 %v271
      %v404 = vpop.f32.mrb[0].mxu0
      %v405 = vadd.f32 0.0, %v404
      %v406 = vpop.f32.mrb[0].mxu0
      %407 = vmatprep.mubr.f32.mxu0 0.0
      %408 = vmatmul.mubr.f32.gmra.mrb[0].mxu0 %v274
      %v409 = vpop.f32.mrb[0].mxu0
      %v410 = vadd.f32 0.0, %v409
      %v411 = vpop.f32.mrb[0].mxu0
      %412 = vmatprep.mubr.f32.mxu0 0.0
      %413 = vmatmul.mubr.f32.gmra.mrb[0].mxu0 %v277
      %v414 = vpop.f32.mrb[0].mxu0
      %v415 = vadd.f32 0.0, %v414
      %v416 = vpop.f32.mrb[0].mxu0
      %417 = vmatprep.mubr.f32.mxu0 0.0
      %418 = vmatmul.mubr.f32.gmra.mrb[0].mxu0 %v280
      %v419 = vpop.f32.mrb[0].mxu0
      %v420 = vadd.f32 0.0, %v419
      %v421 = vpop.f32.mrb[0].mxu0
      %422 = vmatprep.mubr.f32.mxu0 0.0
      %423 = vmatmul.mubr.f32.gmra.mrb[0].mxu0 %v283
      %v424 = vpop.f32.mrb[0].mxu0
      %v425 = vadd.f32 0.0, %v424
      %v426 = vpop.f32.mrb[0].mxu0
      %427 = vmatprep.mubr.f32.mxu0 0.0
      %428 = vmatmul.mubr.f32.gmra.mrb[0].mxu0 %v286
      %v429 = vpop.f32.mrb[0].mxu0
      %v430 = vadd.f32 0.0, %v429
      %v431 = vpop.f32.mrb[0].mxu0
      %432 = vdwg.mxu0
      %433 = vst.msk [vmem:[%s207] sm:$0xff] %vm239, %v355
      %434 = vst.msk [vmem:[%s207 + $0x8] sm:$0xff] %vm239, %v360
      %435 = vst.msk [vmem:[%s207 + $0x10] sm:$0xff] %vm239, %v365
      %436 = vst.msk [vmem:[%s207 + $0x18] sm:$0xff] %vm239, %v370
      %437 = vst.msk [vmem:[%s207 + $0x20] sm:$0xff] %vm239, %v375
      %438 = vst.msk [vmem:[%s207 + $0x28] sm:$0xff] %vm239, %v380
      %439 = vst.msk [vmem:[%s207 + $0x30] sm:$0xff] %vm239, %v385
      %440 = vst.msk [vmem:[%s207 + $0x38] sm:$0xff] %vm239, %v390
      %441 = vst.msk [vmem:[%s207 + $0x40] sm:$0xff] %vm239, %v395
      %442 = vst.msk [vmem:[%s207 + $0x48] sm:$0xff] %vm239, %v400
      %443 = vst.msk [vmem:[%s207 + $0x50] sm:$0xff] %vm239, %v405
      %444 = vst.msk [vmem:[%s207 + $0x58] sm:$0xff] %vm239, %v410
      %445 = vst.msk [vmem:[%s207 + $0x60] sm:$0xff] %vm239, %v415
      %446 = vst.msk [vmem:[%s207 + $0x68] sm:$0xff] %vm239, %v420
      %447 = vst.msk [vmem:[%s207 + $0x70] sm:$0xff] %vm239, %v425
      %448 = vst.msk [vmem:[%s207 + $0x78] sm:$0xff] %vm239, %v430
      %v449 = vld [vmem:[%s2] sm:$0xff]
      %v450 = vld [vmem:[%s2 + $0x8] sm:$0xff]
      %v451 = vld [vmem:[%s2 + $0x10] sm:$0xff]
      %v452 = vld [vmem:[%s2 + $0x18] sm:$0xff]
      %v453 = vld [vmem:[%s2 + $0x20] sm:$0xff]
      %v454 = vld [vmem:[%s2 + $0x28] sm:$0xff]
      %v455 = vld [vmem:[%s2 + $0x30] sm:$0xff]
      %v456 = vld [vmem:[%s2 + $0x38] sm:$0xff]
      %v458 = vsel %vm239, %v355, 0
      %v461 = vsel %vm239, %v360, 0
      %v464 = vsel %vm239, %v365, 0
      %v467 = vsel %vm239, %v370, 0
      %v470 = vsel %vm239, %v375, 0
      %v473 = vsel %vm239, %v380, 0
      %v476 = vsel %vm239, %v385, 0
      %v479 = vsel %vm239, %v390, 0
      %v482 = vsel %vm239, %v395, 0
      %v485 = vsel %vm239, %v400, 0
      %v488 = vsel %vm239, %v405, 0
      %v491 = vsel %vm239, %v410, 0
      %v494 = vsel %vm239, %v415, 0
      %v497 = vsel %vm239, %v420, 0
      %v500 = vsel %vm239, %v425, 0
      %v503 = vsel %vm239, %v430, 0
      %505 = vmatprep.subr.mxu0 0.0
      %506 = vmatpush1.msra.mxu0 %v449
      %507 = vmatprep.subr.mxu0 0.0
      %508 = vmatpush1.msra.mxu0 %v450
      %509 = vmatprep.subr.mxu0 0.0
      %510 = vmatpush1.msra.mxu0 %v451
      %511 = vmatprep.subr.mxu0 0.0
      %512 = vmatpush1.msra.mxu0 %v452
      %513 = vmatprep.subr.mxu0 0.0
      %514 = vmatpush1.msra.mxu0 %v453
      %515 = vmatprep.subr.mxu0 0.0
      %516 = vmatpush1.msra.mxu0 %v454
      %517 = vmatprep.subr.mxu0 0.0
      %518 = vmatpush1.msra.mxu0 %v455
      %519 = vmatprep.subr.mxu0 0.0
      %520 = vmatpush1.msra.mxu0 %v456
      %521 = vmatprep.subr.mxu0 0.0
      %522 = vmatpush1.msra.mxu0 0.0
      %523 = vmatprep.subr.mxu0 0.0
      %524 = vmatpush1.msra.mxu0 0.0
      %525 = vmatprep.subr.mxu0 0.0
      %526 = vmatpush1.msra.mxu0 0.0
      %527 = vmatprep.subr.mxu0 0.0
      %528 = vmatpush1.msra.mxu0 0.0
      %529 = vmatprep.subr.mxu0 0.0
      %530 = vmatpush1.msra.mxu0 0.0
      %531 = vmatprep.subr.mxu0 0.0
      %532 = vmatpush1.msra.mxu0 0.0
      %533 = vmatprep.subr.mxu0 0.0
      %534 = vmatpush1.msra.mxu0 0.0
      %535 = vmatprep.subr.mxu0 0.0
      %536 = vmatpush1.msra.mxu0 0.0
      %537 = vmatprep.subr.mxu0 0.0
      %538 = vmatpush1.msra.mxu0 0.0
      %539 = vmatprep.subr.mxu0 0.0
      %540 = vmatpush1.msra.mxu0 0.0
      %541 = vmatprep.subr.mxu0 0.0
      %542 = vmatpush1.msra.mxu0 0.0
      %543 = vmatprep.subr.mxu0 0.0
      %544 = vmatpush1.msra.mxu0 0.0
      %545 = vmatprep.subr.mxu0 0.0
      %546 = vmatpush1.msra.mxu0 0.0
      %547 = vmatprep.subr.mxu0 0.0
      %548 = vmatpush1.msra.mxu0 0.0
      %549 = vmatprep.subr.mxu0 0.0
      %550 = vmatpush1.msra.mxu0 0.0
      %551 = vmatprep.subr.mxu0 0.0
      %552 = vmatpush1.msra.mxu0 0.0
      %553 = vmatprep.subr.mxu0 0.0
      %554 = vmatpush1.msra.mxu0 0.0
      %555 = vmatprep.subr.mxu0 0.0
      %556 = vmatpush1.msra.mxu0 0.0
      %557 = vmatprep.subr.mxu0 0.0
      %558 = vmatpush1.msra.mxu0 0.0
      %559 = vmatprep.subr.mxu0 0.0
      %560 = vmatpush1.msra.mxu0 0.0
      %561 = vmatprep.subr.mxu0 0.0
      %562 = vmatpush1.msra.mxu0 0.0
      %563 = vmatprep.subr.mxu0 0.0
      %564 = vmatpush1.msra.mxu0 0.0
      %565 = vmatprep.subr.mxu0 0.0
      %566 = vmatpush1.msra.mxu0 0.0
      %567 = vmatprep.subr.mxu0 0.0
      %568 = vmatpush1.msra.mxu0 0.0
      %569 = vmatprep.mubr.f32.mxu0 0.0
      %570 = vmatmul.mubr.f32.gmra.mrb[0].mxu0 %v458
      %v571 = vpop.f32.mrb[0].mxu0
      %v572 = vadd.f32 0.0, %v571
      %v573 = vpop.f32.mrb[0].mxu0
      %574 = vmatprep.mubr.f32.mxu0 0.0
      %575 = vmatmul.mubr.f32.gmra.mrb[0].mxu0 %v461
      %v576 = vpop.f32.mrb[0].mxu0
      %v577 = vadd.f32 0.0, %v576
      %v578 = vpop.f32.mrb[0].mxu0
      %579 = vmatprep.mubr.f32.mxu0 0.0
      %580 = vmatmul.mubr.f32.gmra.mrb[0].mxu0 %v464
      %v581 = vpop.f32.mrb[0].mxu0
      %v582 = vadd.f32 0.0, %v581
      %v583 = vpop.f32.mrb[0].mxu0
      %584 = vmatprep.mubr.f32.mxu0 0.0
      %585 = vmatmul.mubr.f32.gmra.mrb[0].mxu0 %v467
      %v586 = vpop.f32.mrb[0].mxu0
      %v587 = vadd.f32 0.0, %v586
      %v588 = vpop.f32.mrb[0].mxu0
      %589 = vmatprep.mubr.f32.mxu0 0.0
      %590 = vmatmul.mubr.f32.gmra.mrb[0].mxu0 %v470
      %v591 = vpop.f32.mrb[0].mxu0
      %v592 = vadd.f32 0.0, %v591
      %v593 = vpop.f32.mrb[0].mxu0
      %594 = vmatprep.mubr.f32.mxu0 0.0
      %595 = vmatmul.mubr.f32.gmra.mrb[0].mxu0 %v473
      %v596 = vpop.f32.mrb[0].mxu0
      %v597 = vadd.f32 0.0, %v596
      %v598 = vpop.f32.mrb[0].mxu0
      %599 = vmatprep.mubr.f32.mxu0 0.0
      %600 = vmatmul.mubr.f32.gmra.mrb[0].mxu0 %v476
      %v601 = vpop.f32.mrb[0].mxu0
      %v602 = vadd.f32 0.0, %v601
      %v603 = vpop.f32.mrb[0].mxu0
      %604 = vmatprep.mubr.f32.mxu0 0.0
      %605 = vmatmul.mubr.f32.gmra.mrb[0].mxu0 %v479
      %v606 = vpop.f32.mrb[0].mxu0
      %v607 = vadd.f32 0.0, %v606
      %v608 = vpop.f32.mrb[0].mxu0
      %609 = vmatprep.mubr.f32.mxu0 0.0
      %610 = vmatmul.mubr.f32.gmra.mrb[0].mxu0 %v482
      %v611 = vpop.f32.mrb[0].mxu0
      %v612 = vadd.f32 0.0, %v611
      %v613 = vpop.f32.mrb[0].mxu0
      %614 = vmatprep.mubr.f32.mxu0 0.0
      %615 = vmatmul.mubr.f32.gmra.mrb[0].mxu0 %v485
      %v616 = vpop.f32.mrb[0].mxu0
      %v617 = vadd.f32 0.0, %v616
      %v618 = vpop.f32.mrb[0].mxu0
      %619 = vmatprep.mubr.f32.mxu0 0.0
      %620 = vmatmul.mubr.f32.gmra.mrb[0].mxu0 %v488
      %v621 = vpop.f32.mrb[0].mxu0
      %v622 = vadd.f32 0.0, %v621
      %v623 = vpop.f32.mrb[0].mxu0
      %624 = vmatprep.mubr.f32.mxu0 0.0
      %625 = vmatmul.mubr.f32.gmra.mrb[0].mxu0 %v491
      %v626 = vpop.f32.mrb[0].mxu0
      %v627 = vadd.f32 0.0, %v626
      %v628 = vpop.f32.mrb[0].mxu0
      %629 = vmatprep.mubr.f32.mxu0 0.0
      %630 = vmatmul.mubr.f32.gmra.mrb[0].mxu0 %v494
      %v631 = vpop.f32.mrb[0].mxu0
      %v632 = vadd.f32 0.0, %v631
      %v633 = vpop.f32.mrb[0].mxu0
      %634 = vmatprep.mubr.f32.mxu0 0.0
      %635 = vmatmul.mubr.f32.gmra.mrb[0].mxu0 %v497
      %v636 = vpop.f32.mrb[0].mxu0
      %v637 = vadd.f32 0.0, %v636
      %v638 = vpop.f32.mrb[0].mxu0
      %639 = vmatprep.mubr.f32.mxu0 0.0
      %640 = vmatmul.mubr.f32.gmra.mrb[0].mxu0 %v500
      %v641 = vpop.f32.mrb[0].mxu0
      %v642 = vadd.f32 0.0, %v641
      %v643 = vpop.f32.mrb[0].mxu0
      %644 = vmatprep.mubr.f32.mxu0 0.0
      %645 = vmatmul.mubr.f32.gmra.mrb[0].mxu0 %v503
      %v646 = vpop.f32.mrb[0].mxu0
      %v647 = vadd.f32 0.0, %v646
      %v648 = vpop.f32.mrb[0].mxu0
      %649 = vdwg.mxu0
      %vm650 = vcmask 130048
      %651 = vst.msk [vmem:[%s213] sm:$0xff] %vm650, %v572
      %652 = vst.msk [vmem:[%s213 + $0x8] sm:$0xff] %vm650, %v577
      %653 = vst.msk [vmem:[%s213 + $0x10] sm:$0xff] %vm650, %v582
      %654 = vst.msk [vmem:[%s213 + $0x18] sm:$0xff] %vm650, %v587
      %655 = vst.msk [vmem:[%s213 + $0x20] sm:$0xff] %vm650, %v592
      %656 = vst.msk [vmem:[%s213 + $0x28] sm:$0xff] %vm650, %v597
      %657 = vst.msk [vmem:[%s213 + $0x30] sm:$0xff] %vm650, %v602
      %658 = vst.msk [vmem:[%s213 + $0x38] sm:$0xff] %vm650, %v607
      %659 = vst.msk [vmem:[%s213 + $0x40] sm:$0xff] %vm650, %v612
      %660 = vst.msk [vmem:[%s213 + $0x48] sm:$0xff] %vm650, %v617
      %661 = vst.msk [vmem:[%s213 + $0x50] sm:$0xff] %vm650, %v622
      %662 = vst.msk [vmem:[%s213 + $0x58] sm:$0xff] %vm650, %v627
      %663 = vst.msk [vmem:[%s213 + $0x60] sm:$0xff] %vm650, %v632
      %664 = vst.msk [vmem:[%s213 + $0x68] sm:$0xff] %vm650, %v637
      %665 = vst.msk [vmem:[%s213 + $0x70] sm:$0xff] %vm650, %v642
      %666 = vst.msk [vmem:[%s213 + $0x78] sm:$0xff] %vm650, %v647
      %s667 = smul.u32 16, %s16
      %p668 = scmp.lt.s32.totalorder %s667, 31
      %s669 = scalar_select %p668, %s667, 31
      %s670 = smul.addr %s669, 8
      %s671 = scalar_lea.vmem %s3, %s670
      %s672 = smul.u32 16, %s16
      %p673 = scmp.lt.s32.totalorder %s672, 31
      %s674 = scalar_select %p673, %s672, 31
      %s675 = smul.addr %s674, 8
      %s676 = scalar_lea.vmem %s4, %s675
      // Predicated region
      $region33: #{tpu_custom_call.1} parent=31 // pred_check
        %p677 = pneg %p102
      $region34: #{tpu_custom_call.1} parent=31 // pred_check_branch
        %679 = sbr.rel (%p677) target = $region36
      $region35: #{tpu_custom_call.1} parent=31 // pred_region
        %s680 = smul.u32 16, %s16
      $region36: #{tpu_custom_call.1} parent=31 // pred_fallthru
        _
      // Predicated region
      $region37: #{tpu_custom_call.1} parent=31 // pred_check
        %p681 = pneg %p128
      $region38: #{tpu_custom_call.1} parent=31 // pred_check_branch
        %683 = sbr.rel (%p681) target = $region40
      $region39: #{tpu_custom_call.1} parent=31 // pred_region
        %s684 = smul.u32 16, %s16
      $region40: #{tpu_custom_call.1} parent=31 // pred_fallthru
        _
    $region32: #{tpu_custom_call.1} parent=5 // pred_fallthru
      _
    %p685 = scmp.le.s32.totalorder 2, %s11
    // Predicated region
    $region41: #{tpu_custom_call.1} parent=5 // pred_check
      %p686 = pneg %p685
    $region42: #{tpu_custom_call.1} parent=5 // pred_check_branch
      %688 = sbr.rel (%p686) target = $region44
    $region43: #{tpu_custom_call.1} parent=5 // pred_region
      %s689 = ssub.s32 %s11, 2
      // Predicated region
      $region45: #{tpu_custom_call.1} parent=43 // pred_check
        %p690 = pneg %p108
      $region46: #{tpu_custom_call.1} parent=43 // pred_check_branch
        %692 = sbr.rel (%p690) target = $region48
      $region47: #{tpu_custom_call.1} parent=43 // pred_region
        %s693 = smul.u32 16, %s17
        %p694 = scmp.lt.s32.totalorder %s693, 31
        %s695 = scalar_select %p694, %s693, 31
        %s696 = smul.addr %s695, 8
        %s697 = scalar_lea.vmem %s3, %s696
      $region48: #{tpu_custom_call.1} parent=43 // pred_fallthru
        _
      // Predicated region
      $region49: #{tpu_custom_call.1} parent=43 // pred_check
        %p698 = pneg %p134
      $region50: #{tpu_custom_call.1} parent=43 // pred_check_branch
        %700 = sbr.rel (%p698) target = $region52
      $region51: #{tpu_custom_call.1} parent=43 // pred_region
        %s701 = smul.u32 16, %s17
        %p702 = scmp.lt.s32.totalorder %s701, 31
        %s703 = scalar_select %p702, %s701, 31
        %s704 = smul.addr %s703, 8
        %s705 = scalar_lea.vmem %s4, %s704
      $region52: #{tpu_custom_call.1} parent=43 // pred_fallthru
        _
    $region44: #{tpu_custom_call.1} parent=5 // pred_fallthru
      _
  $region6: #{tpu_custom_call.1} parent=0 // loop_footer
    %s15 = sadd.s32 1, %s11
  $region7: #{tpu_custom_call.1} parent=0 // loop_footer_branch
    %10 = sbr.rel target = $region3
  $region8: #{tpu_custom_call.1} parent=0 // loop_exit
    _

</llo_original>
